<compile_context>
chip_gen: v7x
topology: tpu7x:2x2x1
jax: 0.10.0
libtpu: 0.0.40
codegen_flags: <defaults>
</compile_context>

<pallas_src>
import functools

import jax
import jax.numpy as jnp
from jax.experimental import pallas as pl
from jax.experimental.pallas import tpu as pltpu


def _round_up(a, b):
    return (a + b - 1) // b * b


def _maxpool_stride_kernel(x_ref, o_ref, *, H, W, use_roll):
    # x_ref / o_ref: (bc, H*W) lane-dense block (full H*W on the lane axis).
    x = x_ref[...]
    hw = H * W
    col = jax.lax.broadcasted_iota(jnp.int32, x.shape, dimension=1)

    def shift_fwd(v, k):
        # Wrapped shift: out[..., i] = v[..., (i + k) % hw].
        if use_roll:
            # XLU rotate -- no full-block concat temps, frees VALU/vst slots.
            return pltpu.roll(v, hw - k, axis=1)
        # Fallback when H*W is not a multiple of 128 lanes.
        return jnp.concatenate([v[:, k:], v[:, :k]], axis=1)

    # w+1 neighbour; replicate the last column of every row.
    right = shift_fwd(x, 1)
    m = jnp.maximum(x, jnp.where(col % W == W - 1, x, right))
    # h+1 neighbour (of the row-wise max); replicate the last row.
    down = shift_fwd(m, W)
    m = jnp.maximum(m, jnp.where(col >= (H - 1) * W, m, down))

    o_ref[...] = m


def maxpool_stride(x, *, target_block_bytes=1 << 20):
    """Pallas TPU implementation of MaxPoolStride.forward (NCHW, same-shape out)."""
    N, C, H, W = x.shape
    nc, hw = N * C, H * W
    x2 = x.reshape(nc, hw)  # free, contiguous reshape

    itemsize = x.dtype.itemsize
    sublane = max(1, 32 // itemsize)            # 8 f32 / 16 bf16 / 32 int8
    row_bytes = _round_up(hw, 128) * itemsize   # padded VMEM bytes per (n,c) row

    # ~1 MiB lane-dense blocks from the padded footprint.
    bc = max(1, target_block_bytes // row_bytes)
    # Keep >= 2 grid steps (DMA pipelining + both v7x TensorCores) whenever the
    # sublane-alignment rule allows; prefer ~8 steps if blocks stay >= 512 KiB.
    if nc // 8 >= sublane and (nc // 8) * row_bytes >= (512 * 1024):
        bc = min(bc, nc // 8)
    elif nc // 2 >= sublane:
        bc = min(bc, nc // 2)
    # Second-to-last block dim must be a multiple of the sublane tile or equal
    # the full dim; the last dim is the full H*W, which is always legal.
    bc = min(_round_up(bc, sublane), nc)
    grid = (pl.cdiv(nc, bc),)  # partial tail block is masked; rows are independent

    kernel = functools.partial(
        _maxpool_stride_kernel, H=H, W=W, use_roll=(hw % 128 == 0)
    )

    out2 = pl.pallas_call(
        kernel,
        out_shape=jax.ShapeDtypeStruct((nc, hw), x.dtype),
        grid_spec=pltpu.PrefetchScalarGridSpec(
            num_scalar_prefetch=0,
            grid=grid,
            in_specs=[pl.BlockSpec((bc, hw), lambda i: (i, 0))],
            out_specs=pl.BlockSpec((bc, hw), lambda i: (i, 0)),
        ),
        compiler_params=pltpu.CompilerParams(
            dimension_semantics=("parallel",),
        ),
        cost_estimate=pl.CostEstimate(
            flops=3 * nc * hw,            # three element-wise maxes per output
            transcendentals=0,
            bytes_accessed=2 * x.size * itemsize,
        ),
    )(x2)

    return out2.reshape(N, C, H, W)


def _reference(x):
    xp = jnp.pad(x, ((0, 0), (0, 0), (0, 1), (0, 1)), mode="edge")
    return jnp.maximum(
        jnp.maximum(xp[:, :, :-1, :-1], xp[:, :, 1:, :-1]),
        jnp.maximum(xp[:, :, :-1, 1:], xp[:, :, 1:, 1:]),
    )


if __name__ == "__main__":
    key = jax.random.PRNGKey(0)

    # Primary shape: N*C = 16 -> bc = 8, grid = (2,) (pipelined, feeds both
    # v7x TensorCores), lane-dense 256-wide blocks.
    x = jax.random.normal(key, (2, 8, 16, 16), dtype=jnp.float32)
    y = jax.block_until_ready(maxpool_stride(x))
    assert y.shape == x.shape and y.dtype == x.dtype
    assert bool(jnp.all(y == _reference(x)))

    # Second shape exercises a masked partial tail block (N*C = 20, bc = 16).
    x2 = jax.random.normal(jax.random.PRNGKey(0), (5, 4, 16, 16), dtype=jnp.float32)
    y2 = jax.block_until_ready(maxpool_stride(x2))
    assert bool(jnp.all(y2 == _reference(x2)))

    print("KERNEL_OK")
</pallas_src>

<mosaic_0001>
module attributes {stable_mosaic.version = 11 : i64} {
  func.func @_maxpool_stride_kernel(%arg0: i32, %arg1: memref<8x256xf32, #tpu.memory_space<vmem>>, %arg2: memref<8x256xf32, #tpu.memory_space<vmem>>) attributes {dimension_semantics = [#tpu.dimension_semantics<parallel>], iteration_bounds = array<i64: 2>, scalar_prefetch = 0 : i64, scratch_operands = 0 : i64, tpu.core_type = #tpu.core_type<tc>, window_params = [{transform_indices = @transform_0, window_bounds = array<i64: 8, 256>}, {transform_indices = @transform_1, window_bounds = array<i64: 8, 256>}]} {
    %c0 = arith.constant 0 : index
    %c0_0 = arith.constant 0 : index
    %0 = vector.load %arg1[%c0, %c0_0] : memref<8x256xf32, #tpu.memory_space<vmem>>, vector<8x256xf32>
    %1 = tpu.iota {dimensions = array<i32: 1>} : vector<8x256xi32>
    %c255_i32 = arith.constant 255 : i32
    %2 = tpu.dynamic_rotate %0 by %c255_i32 dim 1 : vector<8x256xf32>, i32 -> vector<8x256xf32>
    %c16_i32 = arith.constant 16 : i32
    %c0_i32 = arith.constant 0 : i32
    %3 = arith.cmpi eq, %c16_i32, %c0_i32 : i32
    %c1_i32 = arith.constant 1 : i32
    %4 = arith.select %3, %c1_i32, %c16_i32 : i32
    %5 = vector.broadcast %4 : i32 to vector<8x256xi32>
    %6 = arith.remsi %1, %5 : vector<8x256xi32>
    %c0_i32_1 = arith.constant 0 : i32
    %7 = vector.broadcast %c0_i32_1 : i32 to vector<8x256xi32>
    %8 = arith.cmpi ne, %6, %7 : vector<8x256xi32>
    %c0_i32_2 = arith.constant 0 : i32
    %9 = vector.broadcast %c0_i32_2 : i32 to vector<8x256xi32>
    %10 = arith.cmpi slt, %6, %9 : vector<8x256xi32>
    %c0_i32_3 = arith.constant 0 : i32
    %11 = arith.cmpi slt, %4, %c0_i32_3 : i32
    %12 = vector.broadcast %11 : i1 to vector<8x256xi1>
    %13 = vector.broadcast %12 : vector<8x256xi1> to vector<8x256xi1>
    %14 = arith.xori %10, %13 : vector<8x256xi1>
    %15 = arith.andi %14, %8 : vector<8x256xi1>
    %16 = vector.broadcast %4 : i32 to vector<8x256xi32>
    %17 = arith.addi %6, %16 : vector<8x256xi32>
    %18 = arith.select %15, %17, %6 : vector<8x256xi1>, vector<8x256xi32>
    %c15_i32 = arith.constant 15 : i32
    %19 = vector.broadcast %c15_i32 : i32 to vector<8x256xi32>
    %20 = arith.cmpi eq, %18, %19 : vector<8x256xi32>
    %21 = arith.select %20, %0, %2 : vector<8x256xi1>, vector<8x256xf32>
    %22 = arith.maximumf %0, %21 : vector<8x256xf32>
    %c240_i32 = arith.constant 240 : i32
    %23 = tpu.dynamic_rotate %22 by %c240_i32 dim 1 : vector<8x256xf32>, i32 -> vector<8x256xf32>
    %c240_i32_4 = arith.constant 240 : i32
    %24 = vector.broadcast %c240_i32_4 : i32 to vector<8x256xi32>
    %25 = arith.cmpi sge, %1, %24 : vector<8x256xi32>
    %26 = arith.select %25, %22, %23 : vector<8x256xi1>, vector<8x256xf32>
    %27 = arith.maximumf %22, %26 : vector<8x256xf32>
    %c0_5 = arith.constant 0 : index
    %c0_6 = arith.constant 0 : index
    %28 = vector.load %arg2[%c0_5, %c0_6] : memref<8x256xf32, #tpu.memory_space<vmem>>, vector<8x256xf32>
    tpu.vector_store %arg2[%c0_5, %c0_6], %27 {strides = array<i32>} : memref<8x256xf32, #tpu.memory_space<vmem>>, vector<8x256xf32>,
    return
  }
  func.func @transform_0(%arg0: i32) -> (i32, i32) {
    %c0_i32 = arith.constant 0 : i32
    %c0_i32_0 = arith.constant 0 : i32
    return %arg0, %c0_i32 : i32, i32
  }
  func.func @transform_1(%arg0: i32) -> (i32, i32) {
    %c0_i32 = arith.constant 0 : i32
    %c0_i32_0 = arith.constant 0 : i32
    return %arg0, %c0_i32 : i32, i32
  }
}

</mosaic_0001>

<llo_original>
// kernel: tpu_custom_call.1
$region0: #{tpu_custom_call.1}
  #allocation0 [shape = 'u32[]', space=smem, size = 0x4, offset = 0x4, fixed_abs, tag = 'smem constant byte address 0x4 - core index']
  #allocation1 [shape = 'u32[144,128]{1,0:T(1,128)}', space=vmem, size = 0x12000, scoped, tag = 'internal scratch']
  %s0 = inlined_call_operand.hbm [shape: f32[16,256], index: 0, kind: input, shape index: {}]
  %s1 = inlined_call_operand.hbm [shape: f32[16,256], index: 1, kind: output, shape index: {}]
  %s2 = sld [smem:[#allocation0]]
  $region41: #{tpu_custom_call.1} parent=0
    _
  %s4 = ssub.s32 1, %s2
  %s5 = scalar_select 0, %s4, %s2
  $region1: #{tpu_custom_call.1} parent=0
    #allocation2 [shape = 'u8[16384]{0}', space=vmem, size = 0x4000, scoped, tag = 'input window, operand 0']
    #allocation3 [shape = 's32[2]{0}', space=sflag, size = 0x8, scoped, tag = 'scoped memory for tpu_custom_call.1']
    #allocation4 [shape = 's32[2]{0}', space=sflag, size = 0x8, scoped, tag = 'scoped memory for tpu_custom_call.1']
    #allocation5 [shape = 'u8[16384]{0}', space=vmem, size = 0x4000, scoped, tag = 'output window, operand 0']
    %6 = vsyncpa [#allocation3], 0
    %s7 = scalar_lea.sflag [#allocation3], 1
    %8 = vsyncpa %s7, 0
    %9 = vsyncpa [#allocation4], 0
    %s10 = scalar_lea.sflag [#allocation4], 1
    %11 = vsyncpa %s10, 0
    loop: start=0, step=1, limit=4
    $region2: #{tpu_custom_call.1} parent=1 // loop_pre_header
      _
    $region3: #{tpu_custom_call.1} parent=1 // loop_header
      %s13 = sphi 0, %s17
      %p14 = scmp.ge.s32.totalorder %s13, 4
      %s23 = sphi 0, %s25
      %s26 = sphi 0, %s23
      %s27 = sphi 0, %s26
      %s43 = sphi 0, %s27
      %s49 = sphi 0, %s51
      %s52 = sphi 0, %s49
      %s53 = sphi 0, %s52
      %s69 = sphi 0, %s53
    $region4: #{tpu_custom_call.1} parent=1 // loop_header_branch
      %16 = sbr.rel (%p14) target = $region8
    $region5: #{tpu_custom_call.1} parent=1 // loop_body
      %s18 = ssub.s32 %s13, 1
      %s19 = ssub.s32 %s13, 2
      %s20 = sadd.s32 %s13, 1
      %s21 = ssub.s32 %s13, %s20
      %p22 = scmp.eq.s32.totalorder %s21, 0
      %s24 = sadd.s32 %s23, 1
      %s25 = scalar_select %p22, %s23, %s24
      %p28 = pneg %p22
      %p29 = scmp.eq.s32.totalorder %s13, 1
      %p30 = por %p28, %p29
      %p31 = scmp.ne.s32.totalorder %s23, %s26
      %p32 = scmp.eq.s32.totalorder %s13, 0
      %p33 = por %p31, %p32
      %p34 = scmp.ne.s32.totalorder %s23, %s26
      %p35 = scmp.eq.s32.totalorder %s18, 1
      %p36 = por %p34, %p35
      %p37 = scmp.ne.s32.totalorder %s26, %s27
      %p38 = scmp.eq.s32.totalorder %s18, 0
      %p39 = por %p37, %p38
      %p40 = scmp.ne.s32.totalorder %s26, %s27
      %p41 = scmp.eq.s32.totalorder %s19, 1
      %p42 = por %p40, %p41
      %p44 = scmp.ne.s32.totalorder %s27, %s43
      %p45 = scmp.eq.s32.totalorder %s19, 0
      %p46 = por %p44, %p45
      %s47 = ssub.s32 %s13, %s20
      %p48 = scmp.eq.s32.totalorder %s47, 0
      %s50 = sadd.s32 %s49, 1
      %s51 = scalar_select %p48, %s49, %s50
      %p54 = pneg %p48
      %p55 = scmp.eq.s32.totalorder %s13, 1
      %p56 = por %p54, %p55
      %p57 = scmp.ne.s32.totalorder %s49, %s52
      %p58 = scmp.eq.s32.totalorder %s13, 0
      %p59 = por %p57, %p58
      %p60 = scmp.ne.s32.totalorder %s49, %s52
      %p61 = scmp.eq.s32.totalorder %s18, 1
      %p62 = por %p60, %p61
      %p63 = scmp.ne.s32.totalorder %s52, %s53
      %p64 = scmp.eq.s32.totalorder %s18, 0
      %p65 = por %p63, %p64
      %p66 = scmp.ne.s32.totalorder %s52, %s53
      %p67 = scmp.eq.s32.totalorder %s19, 1
      %p68 = por %p66, %p67
      %p70 = scmp.ne.s32.totalorder %s53, %s69
      %p71 = scmp.eq.s32.totalorder %s19, 0
      %p72 = por %p70, %p71
      %p73 = scmp.le.s32.totalorder 1, %s13
      %p74 = scmp.lt.s32.totalorder %s13, 3
      %p75 = pnand %p73, %p74
      %p76 = pneg %p75
      // Predicated region
      $region9: #{tpu_custom_call.1} parent=5 // pred_check
        _
      $region10: #{tpu_custom_call.1} parent=5 // pred_check_branch
        %78 = sbr.rel (%p75) target = $region12
      $region11: #{tpu_custom_call.1} parent=5 // pred_region
        %s79 = ssub.s32 %s13, 1
      $region12: #{tpu_custom_call.1} parent=5 // pred_fallthru
        _
      %p80 = scmp.lt.s32.totalorder %s13, 2
      // Predicated region
      $region13: #{tpu_custom_call.1} parent=5 // pred_check
        %p81 = pneg %p80
      $region14: #{tpu_custom_call.1} parent=5 // pred_check_branch
        %83 = sbr.rel (%p81) target = $region16
      $region15: #{tpu_custom_call.1} parent=5 // pred_region
        // Predicated region
        $region17: #{tpu_custom_call.1} parent=15 // pred_check
          %p84 = pneg %p33
        $region18: #{tpu_custom_call.1} parent=15 // pred_check_branch
          %86 = sbr.rel (%p84) target = $region20
        $region19: #{tpu_custom_call.1} parent=15 // pred_region
          %s87 = sand.u32 %s23, 1
          %s88 = scalar_lea.sflag [#allocation3], %s87
          %s89 = sand.u32 %s23, 1
          %s90 = smul.addr %s89, 16
          %s91 = scalar_lea.vmem [#allocation2], %s90
          %s93 = ssub.s32 256, 256
          %94 = vsyncadd %s88, %s93
          %s95 = smul.addr %s13, 2
          %s96 = smul.addr %s95, 128
          %s97 = scalar_lea.hbm %s0, %s96
          %s99 = sshll.u32 %s91, 4
          %s100 = int_to_ptr.vmem [resolvable:$true] %s99
          %102 = dma.hbm_to_vmem [thread:$0]  %s97, 256, %s100, %s88
        $region20: #{tpu_custom_call.1} parent=15 // pred_fallthru
          _
      $region16: #{tpu_custom_call.1} parent=5 // pred_fallthru
        _
      %p103 = scmp.le.s32.totalorder 1, %s13
      %p104 = scmp.lt.s32.totalorder %s13, 3
      %p105 = pnand %p103, %p104
      %p106 = pneg %p105
      // Predicated region
      $region21: #{tpu_custom_call.1} parent=5 // pred_check
        _
      $region22: #{tpu_custom_call.1} parent=5 // pred_check_branch
        %108 = sbr.rel (%p105) target = $region24
      $region23: #{tpu_custom_call.1} parent=5 // pred_region
        %s109 = ssub.s32 %s13, 1
        %s110 = sand.u32 %s26, 1
        %s111 = scalar_lea.sflag [#allocation3], %s110
        %s112 = sand.u32 %s26, 1
        %s113 = smul.addr %s112, 16
        %s114 = scalar_lea.vmem [#allocation2], %s113
        // Predicated region
        $region25: #{tpu_custom_call.1} parent=23 // pred_check
          %p115 = pneg %p39
        $region26: #{tpu_custom_call.1} parent=23 // pred_check_branch
          %117 = sbr.rel (%p115) target = $region28
        $region27: #{tpu_custom_call.1} parent=23 // pred_region
          %118 = dma.done %s111, 256
        $region28: #{tpu_custom_call.1} parent=23 // pred_fallthru
          _
        %s119 = sand.u32 %s26, 1
        %s120 = scalar_lea.sflag [#allocation3], %s119
        %s121 = sand.u32 %s26, 1
        %s122 = smul.addr %s121, 16
        %s123 = scalar_lea.vmem [#allocation2], %s122
        %p124 = pneg %p39
        %p125 = pneg %p36
        %p126 = pneg %p65
        %p127 = pneg %p62
        %s128 = sand.u32 %s52, 1
        %s129 = scalar_lea.sflag [#allocation4], %s128
        %s130 = sand.u32 %s52, 1
        %s131 = smul.addr %s130, 16
        %s132 = scalar_lea.vmem [#allocation5], %s131
        %v133 = vld [vmem:[%s114] sm:$0xff]
        %v134 = vld [vmem:[%s114 + $0x8] sm:$0xff]
        %v135 = vlaneseq
        %v136 = vand.u32 %v135, 127
        %v137 = vadd.s32 %v136, 128
        %138 = vrot.lane.b32.xlu0 %v133, 127
        %v139 = vpop.permute.xlu0 %138
        %140 = vrot.lane.b32.xlu0 %v134, 127
        %v141 = vpop.permute.xlu0 %140
        %vm142 = vcmp.lt.s32.totalorder %v136, 127
        %v143 = vsel %vm142, %v139, %v141
        %v144 = vsel %vm142, %v141, %v139
        %vm145 = vcmp.lt.s32.totalorder %v136, 0
        %v146 = vsub.s32 0, %v136
        %v147 = vsel %vm145, %v146, %v136
        %v148 = vshrl.u32 %v147, 4
        %v149 = vand.u32 %v147, 15
        %v150 = vsub.s32 0, %v149
        %v151 = vsel %vm145, %v150, %v149
        %vm152 = vcmp.lt.s32.totalorder %v137, 0
        %v153 = vsub.s32 0, %v137
        %v154 = vsel %vm152, %v153, %v137
        %v155 = vshrl.u32 %v154, 4
        %v156 = vand.u32 %v154, 15
        %v157 = vsub.s32 0, %v156
        %v158 = vsel %vm152, %v157, %v156
        %vm159 = vcmp.ne.s32.totalorder %v151, 0
        %vm160 = vcmp.ne.s32.totalorder %v158, 0
        %vm161 = vcmp.lt.s32.totalorder %v151, 0
        %vm162 = vcmp.lt.s32.totalorder %v158, 0
        %vm163 = vmand %vm161, %vm159
        %vm164 = vmand %vm162, %vm160
        %v165 = vadd.s32 %v151, 16
        %v166 = vadd.s32 %v158, 16
        %v167 = vsel %vm163, %v165, %v151
        %v168 = vsel %vm164, %v166, %v158
        %vm169 = vcmp.eq.s32.totalorder %v167, 15
        %vm170 = vcmp.eq.s32.totalorder %v168, 15
        %v171 = vsel %vm169, %v133, %v143
        %v172 = vsel %vm170, %v134, %v144
        %v173 = vmax.f32 %v133, %v171
        %v174 = vmax.f32 %v134, %v172
        %175 = vrot.lane.b32.xlu0 %v173, 112
        %v176 = vpop.permute.xlu0 %175
        %177 = vrot.lane.b32.xlu0 %v174, 112
        %v178 = vpop.permute.xlu0 %177
        %vm179 = vcmp.lt.s32.totalorder %v136, 112
        %v180 = vsel %vm179, %v176, %v178
        %v181 = vsel %vm179, %v178, %v176
        %vm182 = vcmp.ge.s32.totalorder %v136, 240
        %vm183 = vcmp.ge.s32.totalorder %v137, 240
        %v184 = vsel %vm182, %v173, %v180
        %v185 = vsel %vm183, %v174, %v181
        %v186 = vmax.f32 %v173, %v184
        %v187 = vmax.f32 %v174, %v185
        %188 = vst [vmem:[%s132] sm:$0xff] %v186
        %189 = vst [vmem:[%s132 + $0x8] sm:$0xff] %v187
        %s190 = sand.u32 %s52, 1
        %s191 = scalar_lea.sflag [#allocation4], %s190
        %s192 = sand.u32 %s52, 1
        %s193 = smul.addr %s192, 16
        %s194 = scalar_lea.vmem [#allocation5], %s193
        // Predicated region
        $region29: #{tpu_custom_call.1} parent=23 // pred_check
          %p195 = pneg %p62
        $region30: #{tpu_custom_call.1} parent=23 // pred_check_branch
          %197 = sbr.rel (%p195) target = $region32
        $region31: #{tpu_custom_call.1} parent=23 // pred_region
          %s199 = ssub.s32 256, 256
          %200 = vsyncadd %s191, %s199
          %s201 = smul.addr %s18, 2
          %s202 = smul.addr %s201, 128
          %s203 = scalar_lea.hbm %s1, %s202
          %s205 = sshll.u32 %s194, 4
          %s206 = int_to_ptr.vmem [resolvable:$true] %s205
          %208 = dma.vmem_to_hbm [thread:$0]  %s206, 256, %s203, %s191
        $region32: #{tpu_custom_call.1} parent=23 // pred_fallthru
          _
      $region24: #{tpu_custom_call.1} parent=5 // pred_fallthru
        _
      %p209 = scmp.le.s32.totalorder 2, %s13
      // Predicated region
      $region33: #{tpu_custom_call.1} parent=5 // pred_check
        %p210 = pneg %p209
      $region34: #{tpu_custom_call.1} parent=5 // pred_check_branch
        %212 = sbr.rel (%p210) target = $region36
      $region35: #{tpu_custom_call.1} parent=5 // pred_region
        %s213 = ssub.s32 %s13, 2
        // Predicated region
        $region37: #{tpu_custom_call.1} parent=35 // pred_check
          %p214 = pneg %p68
        $region38: #{tpu_custom_call.1} parent=35 // pred_check_branch
          %216 = sbr.rel (%p214) target = $region40
        $region39: #{tpu_custom_call.1} parent=35 // pred_region
          %s217 = sand.u32 %s53, 1
          %s218 = scalar_lea.sflag [#allocation4], %s217
          %s219 = sand.u32 %s53, 1
          %s220 = smul.addr %s219, 16
          %s221 = scalar_lea.vmem [#allocation5], %s220
          %222 = dma.done %s218, 256
        $region40: #{tpu_custom_call.1} parent=35 // pred_fallthru
          _
      $region36: #{tpu_custom_call.1} parent=5 // pred_fallthru
        _
    $region6: #{tpu_custom_call.1} parent=1 // loop_footer
      %s17 = sadd.s32 1, %s13
    $region7: #{tpu_custom_call.1} parent=1 // loop_footer_branch
      %12 = sbr.rel target = $region3
    $region8: #{tpu_custom_call.1} parent=1 // loop_exit
      _
    %223 = vsyncpa [#allocation3], 1
    %s224 = scalar_lea.sflag [#allocation3], 1
    %225 = vsyncpa %s224, 1
    %226 = vsyncpa [#allocation4], 1
    %s227 = scalar_lea.sflag [#allocation4], 1
    %228 = vsyncpa %s227, 1

</llo_original>
